<compile_context>
chip_gen: v6e
topology: v6e:2x2x1
jax: 0.10.0
libtpu: 0.0.40
codegen_flags: <defaults>
</compile_context>

<pallas_src>
import functools
import math

import jax
import jax.numpy as jnp
from jax import lax
from jax.experimental import pallas as pl
from jax.experimental.pallas import tpu as pltpu


def _resblock_kernel(x_ref, w1_ref, w2_ref, o_ref, *, eps: float):
    """Fused ResBlock on a (tb, C, T) block: conv1 -> LN -> silu -> conv2 -> LN -> +x -> silu."""
    tb, c, t = x_ref.shape
    n = c * t

    # Hoisted once per grid step (shared by every batch row and both convs).
    col = lax.broadcasted_iota(jnp.int32, (c, t), 1)
    mask_lo = col == 0          # where x[t-1] would wrap around (left zero pad)
    mask_hi = col == t - 1      # where x[t+1] would wrap around (right zero pad)
    ones_row = jnp.ones((1, t), jnp.float32)           # bias row for the fused matmul
    w1 = w1_ref[...].astype(jnp.float32)                # (C, 3C+1): [tap0|tap1|tap2|bias]
    w2 = w2_ref[...].astype(jnp.float32)                # (C, 3C+1)
    # TODO(synk): for bf16 models keep MXU operands in bf16 (LN stats stay f32); the
    # demo runs f32 end to end so everything is f32 here.

    def conv3(h, w):
        # Conv1d(k=3, pad=1, stride=1): lane rotations (XLU) + edge masks build the
        # t-1 / t+1 shifted copies; taps + bias collapse into a single MXU matmul.
        h_prev = jnp.where(mask_lo, 0.0, pltpu.roll(h, shift=1, axis=1))
        h_next = jnp.where(mask_hi, 0.0, pltpu.roll(h, shift=t - 1, axis=1))  # == shift -1
        stacked = jnp.concatenate([h_prev, h, h_next, ones_row], axis=0)       # (3C+1, T)
        return jnp.dot(w, stacked, preferred_element_type=jnp.float32)

    def layer_norm(h):
        # Single-pass stats over the whole (C, T) slab, population variance, f32.
        s1 = jnp.sum(h)
        s2 = jnp.sum(h * h)
        mean = s1 / n
        var = s2 / n - mean * mean
        return (h - mean) * lax.rsqrt(var + eps)

    def silu(h):
        # exp on the EUP; approx reciprocal also on the EUP -> no VALU divide refinement.
        return h * pl.reciprocal(1.0 + jnp.exp(-h), approx=True)

    def body(b, carry):
        x = x_ref[b].astype(jnp.float32)                # (C, T)
        y = conv3(x, w1)
        y = silu(layer_norm(y))
        y = conv3(y, w2)
        y = layer_norm(y)
        # Identity residual (stride == 1, num_ins == num_outs) fused into the epilogue.
        o_ref[b] = silu(y + x).astype(o_ref.dtype)
        return carry

    # fori_loop (not a Python for): bounds live ranges, keeps the loop visible to LLO.
    lax.fori_loop(0, tb, body, 0, unroll=True)
    # TODO(synk): projection residual branch (Conv1d kernel=1 + LayerNorm, used when
    # stride != 1 or num_ins != num_outs) is not implemented in this kernel.


def _fuse_conv(w, b):
    """(C_out, C_in, 3) PyTorch Conv1d weight + (C_out,) bias -> (C_out, 3*C_in + 1).

    Column order matches the in-kernel stack [x[t-1]; x[t]; x[t+1]; ones]:
    tap k=0 hits x[t-1], k=1 hits x[t], k=2 hits x[t+1], last column is the bias.
    """
    return jnp.concatenate([w[:, :, 0], w[:, :, 1], w[:, :, 2], b[:, None]], axis=1)


def _default_rows_per_step(batch: int) -> int:
    """Rows per grid step: fat steps on single-TC v5e/v6e, even-length grid on v7x."""
    try:
        dual_tc = "v7" in jax.devices()[0].device_kind.lower()
    except Exception:  # e.g. interpret mode on CPU
        dual_tc = False
    if dual_tc and batch % 2 == 0:
        tb = min(8, max(1, batch // 2))          # grid length >= 2 and even
        while batch % tb or (batch // tb) % 2:
            tb -= 1
        return max(tb, 1)
    tb = min(8, batch)                           # single TC: minimize grid steps
    while batch % tb:
        tb -= 1
    return tb


def resblock_forward(x, w1, b1, w2, b2, *, eps: float = 1e-5, rows_per_step: int | None = None):
    """ResBlock forward. x: (B, C, T); w1, w2: (C, C, 3) PyTorch Conv1d layout; b: (C,)."""
    b_, c, t = x.shape
    assert w1.shape == (c, c, 3) and b1.shape == (c,)
    assert w2.shape == (c, c, 3) and b2.shape == (c,)
    # T is kept as the full last (lane) dim of the block; a multiple of 128 gives
    # unmasked full-width stores (true for the demo T=128).

    tb = rows_per_step if rows_per_step is not None else _default_rows_per_step(b_)
    assert b_ % tb == 0

    w1f = _fuse_conv(w1.astype(jnp.float32), b1.astype(jnp.float32))   # (C, 3C+1)
    w2f = _fuse_conv(w2.astype(jnp.float32), b2.astype(jnp.float32))   # (C, 3C+1)

    kernel = functools.partial(_resblock_kernel, eps=eps)
    return pl.pallas_call(
        kernel,
        out_shape=jax.ShapeDtypeStruct((b_, c, t), x.dtype),
        grid_spec=pltpu.PrefetchScalarGridSpec(
            num_scalar_prefetch=0,
            grid=(b_ // tb,),
            in_specs=[
                pl.BlockSpec((tb, c, t), lambda i: (i, 0, 0)),
                pl.BlockSpec((c, 3 * c + 1), lambda i: (0, 0)),   # resident fused weights
                pl.BlockSpec((c, 3 * c + 1), lambda i: (0, 0)),
            ],
            out_specs=pl.BlockSpec((tb, c, t), lambda i: (i, 0, 0)),
        ),
        compiler_params=pltpu.CompilerParams(
            dimension_semantics=("parallel",),
            vmem_limit_bytes=32 * 1024 * 1024,
        ),
    )(x, w1f, w2f)


def resblock_ref(x, w1, b1, w2, b2, eps: float = 1e-5):
    """Pure-JAX reference matching the PyTorch ResBlock (identity residual)."""
    def conv1d(h, w, b):
        y = lax.conv_general_dilated(
            h, w, window_strides=(1,), padding=[(1, 1)],
            dimension_numbers=("NCH", "OIH", "NCH"),
            precision=lax.Precision.HIGHEST)
        return y + b[None, :, None]

    def ln(h):
        m = h.mean(axis=(1, 2), keepdims=True)
        v = ((h - m) ** 2).mean(axis=(1, 2), keepdims=True)
        return (h - m) / jnp.sqrt(v + eps)

    h = jax.nn.silu(ln(conv1d(x, w1, b1)))
    h = ln(conv1d(h, w2, b2))
    return jax.nn.silu(h + x)


if __name__ == "__main__":
    key = jax.random.PRNGKey(0)
    k1, k2, k3, k4, k5 = jax.random.split(key, 5)
    # Small shapes consistent with the module: (batch=2, channels=16, seq=128);
    # stride=1 and num_ins == num_outs -> identity residual path.
    B, C, T = 2, 16, 128
    scale = 1.0 / (3 * C) ** 0.5
    x = jax.random.normal(k1, (B, C, T), dtype=jnp.float32)
    w1 = jax.random.uniform(k2, (C, C, 3), jnp.float32, -scale, scale)
    b1 = jax.random.uniform(k3, (C,), jnp.float32, -scale, scale)
    w2 = jax.random.uniform(k4, (C, C, 3), jnp.float32, -scale, scale)
    b2 = jax.random.uniform(k5, (C,), jnp.float32, -scale, scale)

    out = jax.block_until_ready(resblock_forward(x, w1, b1, w2, b2))
    ref = jax.block_until_ready(resblock_ref(x, w1, b1, w2, b2))

    assert out.shape == ref.shape and out.dtype == ref.dtype
    err = float(jnp.max(jnp.abs(out - ref)))
    # The approx (EUP) reciprocal in SiLU bounds the relative error at ~4e-3 worst case
    # (bf16 fallback in interpret mode); structural bugs would produce O(1) errors.
    assert jnp.allclose(out, ref, rtol=1e-2, atol=1e-2), f"max abs err {err}"
    print("KERNEL_OK")
</pallas_src>

<mosaic_0001>
module attributes {stable_mosaic.version = 11 : i64} {
  func.func @_resblock_kernel(%arg0: i32, %arg1: memref<2x16x128xf32, #tpu.memory_space<vmem>>, %arg2: memref<16x49xf32, #tpu.memory_space<vmem>>, %arg3: memref<16x49xf32, #tpu.memory_space<vmem>>, %arg4: memref<2x16x128xf32, #tpu.memory_space<vmem>>) attributes {dimension_semantics = [#tpu.dimension_semantics<parallel>], iteration_bounds = array<i64: 1>, scalar_prefetch = 0 : i64, scratch_operands = 0 : i64, tpu.core_type = #tpu.core_type<tc>, window_params = [{transform_indices = @transform_0, window_bounds = array<i64: 2, 16, 128>}, {pipeline_mode = #tpu.pipeline_mode<synchronous>, transform_indices = @transform_1, window_bounds = array<i64: 16, 49>}, {pipeline_mode = #tpu.pipeline_mode<synchronous>, transform_indices = @transform_2, window_bounds = array<i64: 16, 49>}, {transform_indices = @transform_3, window_bounds = array<i64: 2, 16, 128>}]} {
    %0 = tpu.iota {dimensions = array<i32: 1>} : vector<16x128xi32>
    %c0_i32 = arith.constant 0 : i32
    %1 = vector.broadcast %c0_i32 : i32 to vector<16x128xi32>
    %2 = arith.cmpi eq, %0, %1 : vector<16x128xi32>
    %c127_i32 = arith.constant 127 : i32
    %3 = vector.broadcast %c127_i32 : i32 to vector<16x128xi32>
    %4 = arith.cmpi eq, %0, %3 : vector<16x128xi32>
    %cst = arith.constant 1.000000e+00 : f32
    %5 = vector.broadcast %cst : f32 to vector<1x128xf32>
    %c0 = arith.constant 0 : index
    %c0_0 = arith.constant 0 : index
    %6 = vector.load %arg2[%c0, %c0_0] : memref<16x49xf32, #tpu.memory_space<vmem>>, vector<16x49xf32>
    %c0_1 = arith.constant 0 : index
    %c0_2 = arith.constant 0 : index
    %7 = vector.load %arg3[%c0_1, %c0_2] : memref<16x49xf32, #tpu.memory_space<vmem>>, vector<16x49xf32>
    %c0_i32_3 = arith.constant 0 : i32
    %8 = arith.index_cast %c0_i32_3 : i32 to index
    %c0_4 = arith.constant 0 : index
    %c0_5 = arith.constant 0 : index
    %9 = vector.load %arg1[%8, %c0_4, %c0_5] : memref<2x16x128xf32, #tpu.memory_space<vmem>>, vector<1x16x128xf32>
    %10 = vector.shape_cast %9 : vector<1x16x128xf32> to vector<16x128xf32>
    %c1_i32 = arith.constant 1 : i32
    %11 = tpu.dynamic_rotate %10 by %c1_i32 dim 1 : vector<16x128xf32>, i32 -> vector<16x128xf32>
    %cst_6 = arith.constant 0.000000e+00 : f32
    %12 = vector.broadcast %cst_6 : f32 to vector<16x128xf32>
    %13 = arith.select %2, %12, %11 : vector<16x128xi1>, vector<16x128xf32>
    %c127_i32_7 = arith.constant 127 : i32
    %14 = tpu.dynamic_rotate %10 by %c127_i32_7 dim 1 : vector<16x128xf32>, i32 -> vector<16x128xf32>
    %cst_8 = arith.constant 0.000000e+00 : f32
    %15 = vector.broadcast %cst_8 : f32 to vector<16x128xf32>
    %16 = arith.select %4, %15, %14 : vector<16x128xi1>, vector<16x128xf32>
    %17 = tpu.concatenate %13, %10, %16, %5 in 0 : vector<16x128xf32>, vector<16x128xf32>, vector<16x128xf32>, vector<1x128xf32> -> vector<49x128xf32>
    %cst_9 = arith.constant dense<0.000000e+00> : vector<16x128xf32>
    %18 = tpu.matmul %6, %17, %cst_9 {dimension_numbers = #tpu.dot_dimension_numbers<[1], [0], [0], [1], [0, 0, 1, 1], [], []>} : vector<16x49xf32>, vector<49x128xf32>, vector<16x128xf32> -> vector<16x128xf32>
    %19 = vector.shape_cast %18 : vector<16x128xf32> to vector<1x16x128xf32>
    %cst_10 = arith.constant dense<0.000000e+00> : vector<1xf32>
    %20 = vector.multi_reduction <add>, %19, %cst_10 [1, 2] : vector<1x16x128xf32> to vector<1xf32>
    %21 = vector.shape_cast %20 : vector<1xf32> to vector<1x1x1xf32>
    %22 = vector.extract %21[0, 0, 0] : f32 from vector<1x1x1xf32>
    %23 = arith.mulf %18, %18 : vector<16x128xf32>
    %24 = vector.shape_cast %23 : vector<16x128xf32> to vector<1x16x128xf32>
    %cst_11 = arith.constant dense<0.000000e+00> : vector<1xf32>
    %25 = vector.multi_reduction <add>, %24, %cst_11 [1, 2] : vector<1x16x128xf32> to vector<1xf32>
    %26 = vector.shape_cast %25 : vector<1xf32> to vector<1x1x1xf32>
    %27 = vector.extract %26[0, 0, 0] : f32 from vector<1x1x1xf32>
    %cst_12 = arith.constant 2.048000e+03 : f32
    %28 = arith.divf %22, %cst_12 : f32
    %cst_13 = arith.constant 2.048000e+03 : f32
    %29 = arith.divf %27, %cst_13 : f32
    %30 = arith.mulf %28, %28 : f32
    %31 = arith.subf %29, %30 : f32
    %32 = vector.broadcast %28 : f32 to vector<16x128xf32>
    %33 = arith.subf %18, %32 : vector<16x128xf32>
    %cst_14 = arith.constant 9.99999974E-6 : f32
    %34 = arith.addf %31, %cst_14 : f32
    %35 = math.rsqrt %34 : f32
    %36 = vector.broadcast %35 : f32 to vector<16x128xf32>
    %37 = arith.mulf %33, %36 : vector<16x128xf32>
    %cst_15 = arith.constant 0.000000e+00 : f32
    %38 = vector.broadcast %cst_15 : f32 to vector<16x128xf32>
    %39 = arith.subf %38, %37 : vector<16x128xf32>
    %40 = math.exp %39 : vector<16x128xf32>
    %cst_16 = arith.constant 1.000000e+00 : f32
    %41 = vector.broadcast %cst_16 : f32 to vector<16x128xf32>
    %42 = arith.addf %41, %40 : vector<16x128xf32>
    %43 = tpu.reciprocal %42 {approx = true} : vector<16x128xf32> -> vector<16x128xf32>
    %44 = arith.mulf %37, %43 : vector<16x128xf32>
    %c1_i32_17 = arith.constant 1 : i32
    %45 = tpu.dynamic_rotate %44 by %c1_i32_17 dim 1 : vector<16x128xf32>, i32 -> vector<16x128xf32>
    %cst_18 = arith.constant 0.000000e+00 : f32
    %46 = vector.broadcast %cst_18 : f32 to vector<16x128xf32>
    %47 = arith.select %2, %46, %45 : vector<16x128xi1>, vector<16x128xf32>
    %c127_i32_19 = arith.constant 127 : i32
    %48 = tpu.dynamic_rotate %44 by %c127_i32_19 dim 1 : vector<16x128xf32>, i32 -> vector<16x128xf32>
    %cst_20 = arith.constant 0.000000e+00 : f32
    %49 = vector.broadcast %cst_20 : f32 to vector<16x128xf32>
    %50 = arith.select %4, %49, %48 : vector<16x128xi1>, vector<16x128xf32>
    %51 = tpu.concatenate %47, %44, %50, %5 in 0 : vector<16x128xf32>, vector<16x128xf32>, vector<16x128xf32>, vector<1x128xf32> -> vector<49x128xf32>
    %cst_21 = arith.constant dense<0.000000e+00> : vector<16x128xf32>
    %52 = tpu.matmul %7, %51, %cst_21 {dimension_numbers = #tpu.dot_dimension_numbers<[1], [0], [0], [1], [0, 0, 1, 1], [], []>} : vector<16x49xf32>, vector<49x128xf32>, vector<16x128xf32> -> vector<16x128xf32>
    %53 = vector.shape_cast %52 : vector<16x128xf32> to vector<1x16x128xf32>
    %cst_22 = arith.constant dense<0.000000e+00> : vector<1xf32>
    %54 = vector.multi_reduction <add>, %53, %cst_22 [1, 2] : vector<1x16x128xf32> to vector<1xf32>
    %55 = vector.shape_cast %54 : vector<1xf32> to vector<1x1x1xf32>
    %56 = vector.extract %55[0, 0, 0] : f32 from vector<1x1x1xf32>
    %57 = arith.mulf %52, %52 : vector<16x128xf32>
    %58 = vector.shape_cast %57 : vector<16x128xf32> to vector<1x16x128xf32>
    %cst_23 = arith.constant dense<0.000000e+00> : vector<1xf32>
    %59 = vector.multi_reduction <add>, %58, %cst_23 [1, 2] : vector<1x16x128xf32> to vector<1xf32>
    %60 = vector.shape_cast %59 : vector<1xf32> to vector<1x1x1xf32>
    %61 = vector.extract %60[0, 0, 0] : f32 from vector<1x1x1xf32>
    %cst_24 = arith.constant 2.048000e+03 : f32
    %62 = arith.divf %56, %cst_24 : f32
    %cst_25 = arith.constant 2.048000e+03 : f32
    %63 = arith.divf %61, %cst_25 : f32
    %64 = arith.mulf %62, %62 : f32
    %65 = arith.subf %63, %64 : f32
    %66 = vector.broadcast %62 : f32 to vector<16x128xf32>
    %67 = arith.subf %52, %66 : vector<16x128xf32>
    %cst_26 = arith.constant 9.99999974E-6 : f32
    %68 = arith.addf %65, %cst_26 : f32
    %69 = math.rsqrt %68 : f32
    %70 = vector.broadcast %69 : f32 to vector<16x128xf32>
    %71 = arith.mulf %67, %70 : vector<16x128xf32>
    %72 = arith.addf %71, %10 : vector<16x128xf32>
    %cst_27 = arith.constant 0.000000e+00 : f32
    %73 = vector.broadcast %cst_27 : f32 to vector<16x128xf32>
    %74 = arith.subf %73, %72 : vector<16x128xf32>
    %75 = math.exp %74 : vector<16x128xf32>
    %cst_28 = arith.constant 1.000000e+00 : f32
    %76 = vector.broadcast %cst_28 : f32 to vector<16x128xf32>
    %77 = arith.addf %76, %75 : vector<16x128xf32>
    %78 = tpu.reciprocal %77 {approx = true} : vector<16x128xf32> -> vector<16x128xf32>
    %79 = arith.mulf %72, %78 : vector<16x128xf32>
    %80 = arith.index_cast %c0_i32_3 : i32 to index
    %c0_29 = arith.constant 0 : index
    %c0_30 = arith.constant 0 : index
    %81 = vector.load %arg4[%80, %c0_29, %c0_30] : memref<2x16x128xf32, #tpu.memory_space<vmem>>, vector<1x16x128xf32>
    %82 = vector.shape_cast %81 : vector<1x16x128xf32> to vector<16x128xf32>
    %83 = vector.shape_cast %79 : vector<16x128xf32> to vector<1x16x128xf32>
    tpu.vector_store %arg4[%80, %c0_29, %c0_30], %83 {strides = array<i32>} : memref<2x16x128xf32, #tpu.memory_space<vmem>>, vector<1x16x128xf32>,
    %c1_i32_31 = arith.constant 1 : i32
    %84 = arith.index_cast %c1_i32_31 : i32 to index
    %c0_32 = arith.constant 0 : index
    %c0_33 = arith.constant 0 : index
    %85 = vector.load %arg1[%84, %c0_32, %c0_33] : memref<2x16x128xf32, #tpu.memory_space<vmem>>, vector<1x16x128xf32>
    %86 = vector.shape_cast %85 : vector<1x16x128xf32> to vector<16x128xf32>
    %c1_i32_34 = arith.constant 1 : i32
    %87 = tpu.dynamic_rotate %86 by %c1_i32_34 dim 1 : vector<16x128xf32>, i32 -> vector<16x128xf32>
    %cst_35 = arith.constant 0.000000e+00 : f32
    %88 = vector.broadcast %cst_35 : f32 to vector<16x128xf32>
    %89 = arith.select %2, %88, %87 : vector<16x128xi1>, vector<16x128xf32>
    %c127_i32_36 = arith.constant 127 : i32
    %90 = tpu.dynamic_rotate %86 by %c127_i32_36 dim 1 : vector<16x128xf32>, i32 -> vector<16x128xf32>
    %cst_37 = arith.constant 0.000000e+00 : f32
    %91 = vector.broadcast %cst_37 : f32 to vector<16x128xf32>
    %92 = arith.select %4, %91, %90 : vector<16x128xi1>, vector<16x128xf32>
    %93 = tpu.concatenate %89, %86, %92, %5 in 0 : vector<16x128xf32>, vector<16x128xf32>, vector<16x128xf32>, vector<1x128xf32> -> vector<49x128xf32>
    %cst_38 = arith.constant dense<0.000000e+00> : vector<16x128xf32>
    %94 = tpu.matmul %6, %93, %cst_38 {dimension_numbers = #tpu.dot_dimension_numbers<[1], [0], [0], [1], [0, 0, 1, 1], [], []>} : vector<16x49xf32>, vector<49x128xf32>, vector<16x128xf32> -> vector<16x128xf32>
    %95 = vector.shape_cast %94 : vector<16x128xf32> to vector<1x16x128xf32>
    %cst_39 = arith.constant dense<0.000000e+00> : vector<1xf32>
    %96 = vector.multi_reduction <add>, %95, %cst_39 [1, 2] : vector<1x16x128xf32> to vector<1xf32>
    %97 = vector.shape_cast %96 : vector<1xf32> to vector<1x1x1xf32>
    %98 = vector.extract %97[0, 0, 0] : f32 from vector<1x1x1xf32>
    %99 = arith.mulf %94, %94 : vector<16x128xf32>
    %100 = vector.shape_cast %99 : vector<16x128xf32> to vector<1x16x128xf32>
    %cst_40 = arith.constant dense<0.000000e+00> : vector<1xf32>
    %101 = vector.multi_reduction <add>, %100, %cst_40 [1, 2] : vector<1x16x128xf32> to vector<1xf32>
    %102 = vector.shape_cast %101 : vector<1xf32> to vector<1x1x1xf32>
    %103 = vector.extract %102[0, 0, 0] : f32 from vector<1x1x1xf32>
    %cst_41 = arith.constant 2.048000e+03 : f32
    %104 = arith.divf %98, %cst_41 : f32
    %cst_42 = arith.constant 2.048000e+03 : f32
    %105 = arith.divf %103, %cst_42 : f32
    %106 = arith.mulf %104, %104 : f32
    %107 = arith.subf %105, %106 : f32
    %108 = vector.broadcast %104 : f32 to vector<16x128xf32>
    %109 = arith.subf %94, %108 : vector<16x128xf32>
    %cst_43 = arith.constant 9.99999974E-6 : f32
    %110 = arith.addf %107, %cst_43 : f32
    %111 = math.rsqrt %110 : f32
    %112 = vector.broadcast %111 : f32 to vector<16x128xf32>
    %113 = arith.mulf %109, %112 : vector<16x128xf32>
    %cst_44 = arith.constant 0.000000e+00 : f32
    %114 = vector.broadcast %cst_44 : f32 to vector<16x128xf32>
    %115 = arith.subf %114, %113 : vector<16x128xf32>
    %116 = math.exp %115 : vector<16x128xf32>
    %cst_45 = arith.constant 1.000000e+00 : f32
    %117 = vector.broadcast %cst_45 : f32 to vector<16x128xf32>
    %118 = arith.addf %117, %116 : vector<16x128xf32>
    %119 = tpu.reciprocal %118 {approx = true} : vector<16x128xf32> -> vector<16x128xf32>
    %120 = arith.mulf %113, %119 : vector<16x128xf32>
    %c1_i32_46 = arith.constant 1 : i32
    %121 = tpu.dynamic_rotate %120 by %c1_i32_46 dim 1 : vector<16x128xf32>, i32 -> vector<16x128xf32>
    %cst_47 = arith.constant 0.000000e+00 : f32
    %122 = vector.broadcast %cst_47 : f32 to vector<16x128xf32>
    %123 = arith.select %2, %122, %121 : vector<16x128xi1>, vector<16x128xf32>
    %c127_i32_48 = arith.constant 127 : i32
    %124 = tpu.dynamic_rotate %120 by %c127_i32_48 dim 1 : vector<16x128xf32>, i32 -> vector<16x128xf32>
    %cst_49 = arith.constant 0.000000e+00 : f32
    %125 = vector.broadcast %cst_49 : f32 to vector<16x128xf32>
    %126 = arith.select %4, %125, %124 : vector<16x128xi1>, vector<16x128xf32>
    %127 = tpu.concatenate %123, %120, %126, %5 in 0 : vector<16x128xf32>, vector<16x128xf32>, vector<16x128xf32>, vector<1x128xf32> -> vector<49x128xf32>
    %cst_50 = arith.constant dense<0.000000e+00> : vector<16x128xf32>
    %128 = tpu.matmul %7, %127, %cst_50 {dimension_numbers = #tpu.dot_dimension_numbers<[1], [0], [0], [1], [0, 0, 1, 1], [], []>} : vector<16x49xf32>, vector<49x128xf32>, vector<16x128xf32> -> vector<16x128xf32>
    %129 = vector.shape_cast %128 : vector<16x128xf32> to vector<1x16x128xf32>
    %cst_51 = arith.constant dense<0.000000e+00> : vector<1xf32>
    %130 = vector.multi_reduction <add>, %129, %cst_51 [1, 2] : vector<1x16x128xf32> to vector<1xf32>
    %131 = vector.shape_cast %130 : vector<1xf32> to vector<1x1x1xf32>
    %132 = vector.extract %131[0, 0, 0] : f32 from vector<1x1x1xf32>
    %133 = arith.mulf %128, %128 : vector<16x128xf32>
    %134 = vector.shape_cast %133 : vector<16x128xf32> to vector<1x16x128xf32>
    %cst_52 = arith.constant dense<0.000000e+00> : vector<1xf32>
    %135 = vector.multi_reduction <add>, %134, %cst_52 [1, 2] : vector<1x16x128xf32> to vector<1xf32>
    %136 = vector.shape_cast %135 : vector<1xf32> to vector<1x1x1xf32>
    %137 = vector.extract %136[0, 0, 0] : f32 from vector<1x1x1xf32>
    %cst_53 = arith.constant 2.048000e+03 : f32
    %138 = arith.divf %132, %cst_53 : f32
    %cst_54 = arith.constant 2.048000e+03 : f32
    %139 = arith.divf %137, %cst_54 : f32
    %140 = arith.mulf %138, %138 : f32
    %141 = arith.subf %139, %140 : f32
    %142 = vector.broadcast %138 : f32 to vector<16x128xf32>
    %143 = arith.subf %128, %142 : vector<16x128xf32>
    %cst_55 = arith.constant 9.99999974E-6 : f32
    %144 = arith.addf %141, %cst_55 : f32
    %145 = math.rsqrt %144 : f32
    %146 = vector.broadcast %145 : f32 to vector<16x128xf32>
    %147 = arith.mulf %143, %146 : vector<16x128xf32>
    %148 = arith.addf %147, %86 : vector<16x128xf32>
    %cst_56 = arith.constant 0.000000e+00 : f32
    %149 = vector.broadcast %cst_56 : f32 to vector<16x128xf32>
    %150 = arith.subf %149, %148 : vector<16x128xf32>
    %151 = math.exp %150 : vector<16x128xf32>
    %cst_57 = arith.constant 1.000000e+00 : f32
    %152 = vector.broadcast %cst_57 : f32 to vector<16x128xf32>
    %153 = arith.addf %152, %151 : vector<16x128xf32>
    %154 = tpu.reciprocal %153 {approx = true} : vector<16x128xf32> -> vector<16x128xf32>
    %155 = arith.mulf %148, %154 : vector<16x128xf32>
    %156 = arith.index_cast %c1_i32_31 : i32 to index
    %c0_58 = arith.constant 0 : index
    %c0_59 = arith.constant 0 : index
    %157 = vector.load %arg4[%156, %c0_58, %c0_59] : memref<2x16x128xf32, #tpu.memory_space<vmem>>, vector<1x16x128xf32>
    %158 = vector.shape_cast %157 : vector<1x16x128xf32> to vector<16x128xf32>
    %159 = vector.shape_cast %155 : vector<16x128xf32> to vector<1x16x128xf32>
    tpu.vector_store %arg4[%156, %c0_58, %c0_59], %159 {strides = array<i32>} : memref<2x16x128xf32, #tpu.memory_space<vmem>>, vector<1x16x128xf32>,
    %c2_i32 = arith.constant 2 : i32
    return
  }
  func.func @transform_0(%arg0: i32) -> (i32, i32, i32) {
    %c0_i32 = arith.constant 0 : i32
    %c0_i32_0 = arith.constant 0 : i32
    %c0_i32_1 = arith.constant 0 : i32
    return %arg0, %c0_i32, %c0_i32_0 : i32, i32, i32
  }
  func.func @transform_1(%arg0: i32) -> (i32, i32) {
    %c0_i32 = arith.constant 0 : i32
    %c0_i32_0 = arith.constant 0 : i32
    %c0_i32_1 = arith.constant 0 : i32
    return %c0_i32, %c0_i32_0 : i32, i32
  }
  func.func @transform_2(%arg0: i32) -> (i32, i32) {
    %c0_i32 = arith.constant 0 : i32
    %c0_i32_0 = arith.constant 0 : i32
    %c0_i32_1 = arith.constant 0 : i32
    return %c0_i32, %c0_i32_0 : i32, i32
  }
  func.func @transform_3(%arg0: i32) -> (i32, i32, i32) {
    %c0_i32 = arith.constant 0 : i32
    %c0_i32_0 = arith.constant 0 : i32
    %c0_i32_1 = arith.constant 0 : i32
    return %arg0, %c0_i32, %c0_i32_0 : i32, i32, i32
  }
}

</mosaic_0001>

<llo_original>
// kernel: tpu_custom_call.1
$region0: #{tpu_custom_call.1}
  #allocation0 [shape = 'u32[]', space=smem, size = 0x4, offset = 0x4, fixed_abs, tag = 'smem constant byte address 0x4 - core index']
  #allocation1 [shape = 'u32[144,128]{1,0:T(1,128)}', space=vmem, size = 0x12000, scoped, tag = 'internal scratch']
  %s0 = inlined_call_operand.hbm [shape: f32[2,16,128], index: 0, kind: input, shape index: {}]
  %s1 = inlined_call_operand.hbm [shape: f32[16,49], index: 1, kind: input, shape index: {}]
  %s2 = inlined_call_operand.hbm [shape: f32[16,49], index: 2, kind: input, shape index: {}]
  %s3 = inlined_call_operand.hbm [shape: f32[2,16,128], index: 3, kind: output, shape index: {}]
  %s4 = sld [smem:[#allocation0]]
  $region34: #{tpu_custom_call.1} parent=0
    _
  %s6 = ssub.s32 1, %s4
  %s7 = scalar_select 0, %s6, %s4
  $region1: #{tpu_custom_call.1} parent=0
    #allocation2 [shape = 'u8[16384]{0}', space=vmem, size = 0x4000, scoped, tag = 'input window, operand 0, single buffered']
    #allocation3 [shape = 's32[1]{0}', space=sflag, size = 0x4, scoped, tag = 'scoped memory for tpu_custom_call.1']
    #allocation4 [shape = 's32[1]{0}', space=sflag, size = 0x4, scoped, tag = 'scoped memory for tpu_custom_call.1']
    #allocation5 [shape = 'u8[8192]{0}', space=vmem, size = 0x2000, scoped, tag = 'input window, operand 1, single buffered']
    #allocation6 [shape = 's32[1]{0}', space=sflag, size = 0x4, scoped, tag = 'scoped memory for tpu_custom_call.1']
    #allocation7 [shape = 'u8[8192]{0}', space=vmem, size = 0x2000, scoped, tag = 'input window, operand 2, single buffered']
    #allocation8 [shape = 'u8[16384]{0}', space=vmem, size = 0x4000, scoped, tag = 'output window, operand 0, single buffered']
    %8 = vsyncpa [#allocation3], 0
    %9 = vsyncpa [#allocation6], 0
    %10 = vsyncpa [#allocation4], 0
    // Predicated region
    $region2: #{tpu_custom_call.1} parent=1 // pred_check
      _
    $region3: #{tpu_custom_call.1} parent=1 // pred_check_branch
      %12 = sbr.rel (0) target = $region5
    $region4: #{tpu_custom_call.1} parent=1 // pred_region
      %s14 = ssub.s32 512, 512
      %15 = vsyncadd [#allocation3], %s14
      %s16 = sshll.u32 [#allocation2], 4
      %s17 = int_to_ptr.vmem [resolvable:$true] %s16
      %22 = dma.hbm_to_vmem [thread:$0]  %s0, 512, %s17, [#allocation3], 128, 128, 8
    $region5: #{tpu_custom_call.1} parent=1 // pred_fallthru
      _
    // Predicated region
    $region6: #{tpu_custom_call.1} parent=1 // pred_check
      _
    $region7: #{tpu_custom_call.1} parent=1 // pred_check_branch
      %24 = sbr.rel (0) target = $region9
    $region8: #{tpu_custom_call.1} parent=1 // pred_region
      %s26 = ssub.s32 256, 256
      %27 = vsyncadd [#allocation6], %s26
      %s28 = sshll.u32 [#allocation5], 4
      %s29 = int_to_ptr.vmem [resolvable:$true] %s28
      %34 = dma.hbm_to_vmem [thread:$0]  %s1, 256, %s29, [#allocation6], 128, 128, 8
    $region9: #{tpu_custom_call.1} parent=1 // pred_fallthru
      _
    // Predicated region
    $region10: #{tpu_custom_call.1} parent=1 // pred_check
      _
    $region11: #{tpu_custom_call.1} parent=1 // pred_check_branch
      %36 = sbr.rel (0) target = $region13
    $region12: #{tpu_custom_call.1} parent=1 // pred_region
      %s38 = ssub.s32 256, 256
      %39 = vsyncadd [#allocation6], %s38
      %s40 = sshll.u32 [#allocation7], 4
      %s41 = int_to_ptr.vmem [resolvable:$true] %s40
      %46 = dma.hbm_to_vmem [thread:$0]  %s2, 256, %s41, [#allocation6], 128, 128, 8
    $region13: #{tpu_custom_call.1} parent=1 // pred_fallthru
      _
    // Predicated region
    $region14: #{tpu_custom_call.1} parent=1 // pred_check
      _
    $region15: #{tpu_custom_call.1} parent=1 // pred_check_branch
      %48 = sbr.rel (0) target = $region17
    $region16: #{tpu_custom_call.1} parent=1 // pred_region
      %49 = dma.done [#allocation3], 512
    $region17: #{tpu_custom_call.1} parent=1 // pred_fallthru
      _
    // Predicated region
    $region18: #{tpu_custom_call.1} parent=1 // pred_check
      _
    $region19: #{tpu_custom_call.1} parent=1 // pred_check_branch
      %51 = sbr.rel (0) target = $region21
    $region20: #{tpu_custom_call.1} parent=1 // pred_region
      %52 = dma.done [#allocation6], 256
    $region21: #{tpu_custom_call.1} parent=1 // pred_fallthru
      _
    // Predicated region
    $region22: #{tpu_custom_call.1} parent=1 // pred_check
      _
    $region23: #{tpu_custom_call.1} parent=1 // pred_check_branch
      %54 = sbr.rel (0) target = $region25
    $region24: #{tpu_custom_call.1} parent=1 // pred_region
      %55 = dma.done [#allocation6], 256
    $region25: #{tpu_custom_call.1} parent=1 // pred_fallthru
      _
    %v56 = vlaneseq
    %v57 = vand.u32 %v56, 127
    %vm58 = vcmp.eq.s32.totalorder %v57, 0
    %vm59 = vcmp.eq.s32.totalorder %v57, 127
    %v60 = vld [vmem:[#allocation5] sm:$0xff]
    %v61 = vld [vmem:[#allocation5 + $0x8] sm:$0xff]
    %v62 = vld [vmem:[#allocation7] sm:$0xff]
    %v63 = vld [vmem:[#allocation7 + $0x8] sm:$0xff]
    %v64 = vld [vmem:[#allocation2] sm:$0xff]
    %v65 = vld [vmem:[#allocation2 + $0x8] sm:$0xff]
    %66 = vrot.lane.b32.xlu0 %v64, 1
    %v67 = vpop.permute.xlu0 %66
    %68 = vrot.lane.b32.xlu0 %v65, 1
    %v69 = vpop.permute.xlu0 %68
    %v70 = vsel %vm58, 0.0, %v67
    %v71 = vsel %vm58, 0.0, %v69
    %72 = vrot.lane.b32.xlu0 %v64, 127
    %v73 = vpop.permute.xlu0 %72
    %74 = vrot.lane.b32.xlu0 %v65, 127
    %v75 = vpop.permute.xlu0 %74
    %v76 = vsel %vm59, 0.0, %v73
    %v77 = vsel %vm59, 0.0, %v75
    %vm78 = vcmask 400384
    %v80 = vsel %vm78, %v60, 0
    %v83 = vsel %vm78, %v61, 0
    %vm85 = vcmask 1040384
    %v87 = vsel %vm85, 1.0, 0
    %89 = vmatprep.subr.mxu0 0.0
    %90 = vmatpush1.msra.mxu0 0.0
    %91 = vmatprep.subr.mxu0 0.0
    %92 = vmatpush1.msra.mxu0 0.0
    %93 = vmatprep.subr.mxu0 0.0
    %94 = vmatpush1.msra.mxu0 0.0
    %95 = vmatprep.subr.mxu0 0.0
    %96 = vmatpush1.msra.mxu0 0.0
    %97 = vmatprep.subr.mxu0 0.0
    %98 = vmatpush1.msra.mxu0 0.0
    %99 = vmatprep.subr.mxu0 0.0
    %100 = vmatpush1.msra.mxu0 0.0
    %101 = vmatprep.subr.mxu0 0.0
    %102 = vmatpush1.msra.mxu0 0.0
    %103 = vmatprep.subr.mxu0 0.0
    %104 = vmatpush1.msra.mxu0 0.0
    %105 = vmatprep.subr.mxu0 0.0
    %106 = vmatpush1.msra.mxu0 0.0
    %107 = vmatprep.subr.mxu0 0.0
    %108 = vmatpush1.msra.mxu0 %v87
    %109 = vmatprep.subr.mxu0 0.0
    %110 = vmatpush1.msra.mxu0 %v77
    %111 = vmatprep.subr.mxu0 0.0
    %112 = vmatpush1.msra.mxu0 %v76
    %113 = vmatprep.subr.mxu0 0.0
    %114 = vmatpush1.msra.mxu0 %v65
    %115 = vmatprep.subr.mxu0 0.0
    %116 = vmatpush1.msra.mxu0 %v64
    %117 = vmatprep.subr.mxu0 0.0
    %118 = vmatpush1.msra.mxu0 %v71
    %119 = vmatprep.subr.mxu0 0.0
    %120 = vmatpush1.msra.mxu0 %v70
    %121 = vmatprep.subr.mxu0 0.0
    %122 = vmatpush2.msra.mxu0 0.0
    %123 = vmatprep.subr.mxu0 0.0
    %124 = vmatpush2.msra.mxu0 0.0
    %125 = vmatprep.subr.mxu0 0.0
    %126 = vmatpush2.msra.mxu0 0.0
    %127 = vmatprep.subr.mxu0 0.0
    %128 = vmatpush2.msra.mxu0 0.0
    %129 = vmatprep.subr.mxu0 0.0
    %130 = vmatpush2.msra.mxu0 0.0
    %131 = vmatprep.subr.mxu0 0.0
    %132 = vmatpush2.msra.mxu0 0.0
    %133 = vmatprep.subr.mxu0 0.0
    %134 = vmatpush2.msra.mxu0 0.0
    %135 = vmatprep.subr.mxu0 0.0
    %136 = vmatpush2.msra.mxu0 0.0
    %137 = vmatprep.subr.mxu0 0.0
    %138 = vmatpush2.msra.mxu0 0.0
    %139 = vmatprep.subr.mxu0 0.0
    %140 = vmatpush2.msra.mxu0 0.0
    %141 = vmatprep.subr.mxu0 0.0
    %142 = vmatpush2.msra.mxu0 0.0
    %143 = vmatprep.subr.mxu0 0.0
    %144 = vmatpush2.msra.mxu0 0.0
    %145 = vmatprep.subr.mxu0 0.0
    %146 = vmatpush2.msra.mxu0 0.0
    %147 = vmatprep.subr.mxu0 0.0
    %148 = vmatpush2.msra.mxu0 0.0
    %149 = vmatprep.subr.mxu0 0.0
    %150 = vmatpush2.msra.mxu0 0.0
    %151 = vmatprep.subr.mxu0 0.0
    %152 = vmatpush2.msra.mxu0 0.0
    %153 = vmatprep.mubr.f32.mxu0 0.0
    %154 = vmatmul.mubr.f32.gmra.mxu0 %v80
    %v155 = vpop.f32.mrf.mxu0
    %v156 = vadd.f32 0.0, %v155
    %v157 = vpop.f32.mrf.mxu0
    %158 = vmatprep.mubr.f32.mxu0 0.0
    %159 = vmatmul.mubr.f32.gmra.mxu0 %v83
    %v160 = vpop.f32.mrf.mxu0
    %v161 = vadd.f32 0.0, %v160
    %v162 = vpop.f32.mrf.mxu0
    %163 = vdwg.mxu0
    %v164 = vadd.f32 %v156, %v161
    %165 = vadd.xlane.f32.xlu0 %v164
    %v166 = vpop.xlane.xlu0 %165
    %v167 = vrot.slane %v166, 4
    %v168 = vadd.f32 %v166, %v167
    %v169 = vrot.slane %v168, 2
    %v170 = vadd.f32 %v168, %v169
    %v171 = vrot.slane %v170, 1
    %v172 = vadd.f32 %v170, %v171
    %s173 = vtos %v172
    %v174 = vmul.f32 %v156, %v156
    %v175 = vmul.f32 %v161, %v161
    %v176 = vadd.f32 %v174, %v175
    %177 = vadd.xlane.f32.xlu0 %v176
    %v178 = vpop.xlane.xlu0 %177
    %v179 = vrot.slane %v178, 4
    %v180 = vadd.f32 %v178, %v179
    %v181 = vrot.slane %v180, 2
    %v182 = vadd.f32 %v180, %v181
    %v183 = vrot.slane %v182, 1
    %v184 = vadd.f32 %v182, %v183
    %s185 = vtos %v184
    %v186 = vrcp.pop 2048.0
    %s187 = vtos %v186
    %s188 = smul.f32 %s173, %s187
    %v189 = vrcp.pop 2048.0
    %s190 = vtos %v189
    %s191 = smul.f32 %s185, %s190
    %s192 = smul.f32 %s188, %s188
    %s193 = ssub.f32 %s191, %s192
    %v194 = vstv %s188
    %v195 = vsub.f32 %v156, %v194
    %v196 = vsub.f32 %v161, %v194
    %s197 = sadd.f32 %s193, 1e-05
    %v198 = vstv %s197
    %v199 = vrsqrt.pop %v198
    %s200 = vtos %v199
    %v201 = vstv %s200
    %v202 = vmul.f32 %v195, %v201
    %v203 = vmul.f32 %v196, %v201
    %v204 = vsub.f32 0.0, %v202
    %v205 = vsub.f32 0.0, %v203
    %v206 = vmul.f32 %v204, 1.442695
    %v207 = vpow.pop %v206
    %v208 = vmul.f32 %v205, 1.442695
    %v209 = vpow.pop %v208
    %v210 = vadd.f32 %v207, 1.0
    %v211 = vadd.f32 %v209, 1.0
    %v212 = vrcp.pop %v210
    %v213 = vrcp.pop %v211
    %v214 = vmul.f32 %v202, %v212
    %v215 = vmul.f32 %v203, %v213
    %216 = vrot.lane.b32.xlu0 %v214, 1
    %v217 = vpop.permute.xlu0 %216
    %218 = vrot.lane.b32.xlu0 %v215, 1
    %v219 = vpop.permute.xlu0 %218
    %v220 = vsel %vm58, 0.0, %v217
    %v221 = vsel %vm58, 0.0, %v219
    %222 = vrot.lane.b32.xlu0 %v214, 127
    %v223 = vpop.permute.xlu0 %222
    %224 = vrot.lane.b32.xlu0 %v215, 127
    %v225 = vpop.permute.xlu0 %224
    %v226 = vsel %vm59, 0.0, %v223
    %v227 = vsel %vm59, 0.0, %v225
    %v229 = vsel %vm78, %v62, 0
    %v232 = vsel %vm78, %v63, 0
    %234 = vmatprep.subr.mxu0 0.0
    %235 = vmatpush1.msra.mxu0 0.0
    %236 = vmatprep.subr.mxu0 0.0
    %237 = vmatpush1.msra.mxu0 0.0
    %238 = vmatprep.subr.mxu0 0.0
    %239 = vmatpush1.msra.mxu0 0.0
    %240 = vmatprep.subr.mxu0 0.0
    %241 = vmatpush1.msra.mxu0 0.0
    %242 = vmatprep.subr.mxu0 0.0
    %243 = vmatpush1.msra.mxu0 0.0
    %244 = vmatprep.subr.mxu0 0.0
    %245 = vmatpush1.msra.mxu0 0.0
    %246 = vmatprep.subr.mxu0 0.0
    %247 = vmatpush1.msra.mxu0 0.0
    %248 = vmatprep.subr.mxu0 0.0
    %249 = vmatpush1.msra.mxu0 0.0
    %250 = vmatprep.subr.mxu0 0.0
    %251 = vmatpush1.msra.mxu0 0.0
    %252 = vmatprep.subr.mxu0 0.0
    %253 = vmatpush1.msra.mxu0 %v87
    %254 = vmatprep.subr.mxu0 0.0
    %255 = vmatpush1.msra.mxu0 %v227
    %256 = vmatprep.subr.mxu0 0.0
    %257 = vmatpush1.msra.mxu0 %v226
    %258 = vmatprep.subr.mxu0 0.0
    %259 = vmatpush1.msra.mxu0 %v215
    %260 = vmatprep.subr.mxu0 0.0
    %261 = vmatpush1.msra.mxu0 %v214
    %262 = vmatprep.subr.mxu0 0.0
    %263 = vmatpush1.msra.mxu0 %v221
    %264 = vmatprep.subr.mxu0 0.0
    %265 = vmatpush1.msra.mxu0 %v220
    %266 = vmatprep.subr.mxu0 0.0
    %267 = vmatpush2.msra.mxu0 0.0
    %268 = vmatprep.subr.mxu0 0.0
    %269 = vmatpush2.msra.mxu0 0.0
    %270 = vmatprep.subr.mxu0 0.0
    %271 = vmatpush2.msra.mxu0 0.0
    %272 = vmatprep.subr.mxu0 0.0
    %273 = vmatpush2.msra.mxu0 0.0
    %274 = vmatprep.subr.mxu0 0.0
    %275 = vmatpush2.msra.mxu0 0.0
    %276 = vmatprep.subr.mxu0 0.0
    %277 = vmatpush2.msra.mxu0 0.0
    %278 = vmatprep.subr.mxu0 0.0
    %279 = vmatpush2.msra.mxu0 0.0
    %280 = vmatprep.subr.mxu0 0.0
    %281 = vmatpush2.msra.mxu0 0.0
    %282 = vmatprep.subr.mxu0 0.0
    %283 = vmatpush2.msra.mxu0 0.0
    %284 = vmatprep.subr.mxu0 0.0
    %285 = vmatpush2.msra.mxu0 0.0
    %286 = vmatprep.subr.mxu0 0.0
    %287 = vmatpush2.msra.mxu0 0.0
    %288 = vmatprep.subr.mxu0 0.0
    %289 = vmatpush2.msra.mxu0 0.0
    %290 = vmatprep.subr.mxu0 0.0
    %291 = vmatpush2.msra.mxu0 0.0
    %292 = vmatprep.subr.mxu0 0.0
    %293 = vmatpush2.msra.mxu0 0.0
    %294 = vmatprep.subr.mxu0 0.0
    %295 = vmatpush2.msra.mxu0 0.0
    %296 = vmatprep.subr.mxu0 0.0
    %297 = vmatpush2.msra.mxu0 0.0
    %298 = vmatprep.mubr.f32.mxu0 0.0
    %299 = vmatmul.mubr.f32.gmra.mxu0 %v229
    %v300 = vpop.f32.mrf.mxu0
    %v301 = vadd.f32 0.0, %v300
    %v302 = vpop.f32.mrf.mxu0
    %303 = vmatprep.mubr.f32.mxu0 0.0
    %304 = vmatmul.mubr.f32.gmra.mxu0 %v232
    %v305 = vpop.f32.mrf.mxu0
    %v306 = vadd.f32 0.0, %v305
    %v307 = vpop.f32.mrf.mxu0
    %308 = vdwg.mxu0
    %v309 = vadd.f32 %v301, %v306
    %310 = vadd.xlane.f32.xlu0 %v309
    %v311 = vpop.xlane.xlu0 %310
    %v312 = vrot.slane %v311, 4
    %v313 = vadd.f32 %v311, %v312
    %v314 = vrot.slane %v313, 2
    %v315 = vadd.f32 %v313, %v314
    %v316 = vrot.slane %v315, 1
    %v317 = vadd.f32 %v315, %v316
    %s318 = vtos %v317
    %v319 = vmul.f32 %v301, %v301
    %v320 = vmul.f32 %v306, %v306
    %v321 = vadd.f32 %v319, %v320
    %322 = vadd.xlane.f32.xlu0 %v321
    %v323 = vpop.xlane.xlu0 %322
    %v324 = vrot.slane %v323, 4
    %v325 = vadd.f32 %v323, %v324
    %v326 = vrot.slane %v325, 2
    %v327 = vadd.f32 %v325, %v326
    %v328 = vrot.slane %v327, 1
    %v329 = vadd.f32 %v327, %v328
    %s330 = vtos %v329
    %v331 = vrcp.pop 2048.0
    %s332 = vtos %v331
    %s333 = smul.f32 %s318, %s332
    %v334 = vrcp.pop 2048.0
    %s335 = vtos %v334
    %s336 = smul.f32 %s330, %s335
    %s337 = smul.f32 %s333, %s333
    %s338 = ssub.f32 %s336, %s337
    %v339 = vstv %s333
    %v340 = vsub.f32 %v301, %v339
    %v341 = vsub.f32 %v306, %v339
    %s342 = sadd.f32 %s338, 1e-05
    %v343 = vstv %s342
    %v344 = vrsqrt.pop %v343
    %s345 = vtos %v344
    %v346 = vstv %s345
    %v347 = vmul.f32 %v340, %v346
    %v348 = vmul.f32 %v341, %v346
    %v349 = vadd.f32 %v347, %v64
    %v350 = vadd.f32 %v348, %v65
    %v351 = vsub.f32 0.0, %v349
    %v352 = vsub.f32 0.0, %v350
    %v353 = vmul.f32 %v351, 1.442695
    %v354 = vpow.pop %v353
    %v355 = vmul.f32 %v352, 1.442695
    %v356 = vpow.pop %v355
    %v357 = vadd.f32 %v354, 1.0
    %v358 = vadd.f32 %v356, 1.0
    %v359 = vrcp.pop %v357
    %v360 = vrcp.pop %v358
    %v361 = vmul.f32 %v349, %v359
    %v362 = vmul.f32 %v350, %v360
    %363 = vst [vmem:[#allocation8] sm:$0xff] %v361
    %364 = vst [vmem:[#allocation8 + $0x8] sm:$0xff] %v362
    %s365 = scalar_lea.vmem [#allocation2], 16
    %v366 = vld [vmem:[%s365] sm:$0xff]
    %v367 = vld [vmem:[%s365 + $0x8] sm:$0xff]
    %368 = vrot.lane.b32.xlu0 %v366, 1
    %v369 = vpop.permute.xlu0 %368
    %370 = vrot.lane.b32.xlu0 %v367, 1
    %v371 = vpop.permute.xlu0 %370
    %v372 = vsel %vm58, 0.0, %v369
    %v373 = vsel %vm58, 0.0, %v371
    %374 = vrot.lane.b32.xlu0 %v366, 127
    %v375 = vpop.permute.xlu0 %374
    %376 = vrot.lane.b32.xlu0 %v367, 127
    %v377 = vpop.permute.xlu0 %376
    %v378 = vsel %vm59, 0.0, %v375
    %v379 = vsel %vm59, 0.0, %v377
    %380 = vmatprep.subr.mxu0 0.0
    %381 = vmatpush1.msra.mxu0 0.0
    %382 = vmatprep.subr.mxu0 0.0
    %383 = vmatpush1.msra.mxu0 0.0
    %384 = vmatprep.subr.mxu0 0.0
    %385 = vmatpush1.msra.mxu0 0.0
    %386 = vmatprep.subr.mxu0 0.0
    %387 = vmatpush1.msra.mxu0 0.0
    %388 = vmatprep.subr.mxu0 0.0
    %389 = vmatpush1.msra.mxu0 0.0
    %390 = vmatprep.subr.mxu0 0.0
    %391 = vmatpush1.msra.mxu0 0.0
    %392 = vmatprep.subr.mxu0 0.0
    %393 = vmatpush1.msra.mxu0 0.0
    %394 = vmatprep.subr.mxu0 0.0
    %395 = vmatpush1.msra.mxu0 0.0
    %396 = vmatprep.subr.mxu0 0.0
    %397 = vmatpush1.msra.mxu0 0.0
    %398 = vmatprep.subr.mxu0 0.0
    %399 = vmatpush1.msra.mxu0 %v87
    %400 = vmatprep.subr.mxu0 0.0
    %401 = vmatpush1.msra.mxu0 %v379
    %402 = vmatprep.subr.mxu0 0.0
    %403 = vmatpush1.msra.mxu0 %v378
    %404 = vmatprep.subr.mxu0 0.0
    %405 = vmatpush1.msra.mxu0 %v367
    %406 = vmatprep.subr.mxu0 0.0
    %407 = vmatpush1.msra.mxu0 %v366
    %408 = vmatprep.subr.mxu0 0.0
    %409 = vmatpush1.msra.mxu0 %v373
    %410 = vmatprep.subr.mxu0 0.0
    %411 = vmatpush1.msra.mxu0 %v372
    %412 = vmatprep.subr.mxu0 0.0
    %413 = vmatpush2.msra.mxu0 0.0
    %414 = vmatprep.subr.mxu0 0.0
    %415 = vmatpush2.msra.mxu0 0.0
    %416 = vmatprep.subr.mxu0 0.0
    %417 = vmatpush2.msra.mxu0 0.0
    %418 = vmatprep.subr.mxu0 0.0
    %419 = vmatpush2.msra.mxu0 0.0
    %420 = vmatprep.subr.mxu0 0.0
    %421 = vmatpush2.msra.mxu0 0.0
    %422 = vmatprep.subr.mxu0 0.0
    %423 = vmatpush2.msra.mxu0 0.0
    %424 = vmatprep.subr.mxu0 0.0
    %425 = vmatpush2.msra.mxu0 0.0
    %426 = vmatprep.subr.mxu0 0.0
    %427 = vmatpush2.msra.mxu0 0.0
    %428 = vmatprep.subr.mxu0 0.0
    %429 = vmatpush2.msra.mxu0 0.0
    %430 = vmatprep.subr.mxu0 0.0
    %431 = vmatpush2.msra.mxu0 0.0
    %432 = vmatprep.subr.mxu0 0.0
    %433 = vmatpush2.msra.mxu0 0.0
    %434 = vmatprep.subr.mxu0 0.0
    %435 = vmatpush2.msra.mxu0 0.0
    %436 = vmatprep.subr.mxu0 0.0
    %437 = vmatpush2.msra.mxu0 0.0
    %438 = vmatprep.subr.mxu0 0.0
    %439 = vmatpush2.msra.mxu0 0.0
    %440 = vmatprep.subr.mxu0 0.0
    %441 = vmatpush2.msra.mxu0 0.0
    %442 = vmatprep.subr.mxu0 0.0
    %443 = vmatpush2.msra.mxu0 0.0
    %444 = vmatprep.mubr.f32.mxu0 0.0
    %445 = vmatmul.mubr.f32.gmra.mxu0 %v80
    %v446 = vpop.f32.mrf.mxu0
    %v447 = vadd.f32 0.0, %v446
    %v448 = vpop.f32.mrf.mxu0
    %449 = vmatprep.mubr.f32.mxu0 0.0
    %450 = vmatmul.mubr.f32.gmra.mxu0 %v83
    %v451 = vpop.f32.mrf.mxu0
    %v452 = vadd.f32 0.0, %v451
    %v453 = vpop.f32.mrf.mxu0
    %454 = vdwg.mxu0
    %v455 = vadd.f32 %v447, %v452
    %456 = vadd.xlane.f32.xlu0 %v455
    %v457 = vpop.xlane.xlu0 %456
    %v458 = vrot.slane %v457, 4
    %v459 = vadd.f32 %v457, %v458
    %v460 = vrot.slane %v459, 2
    %v461 = vadd.f32 %v459, %v460
    %v462 = vrot.slane %v461, 1
    %v463 = vadd.f32 %v461, %v462
    %s464 = vtos %v463
    %v465 = vmul.f32 %v447, %v447
    %v466 = vmul.f32 %v452, %v452
    %v467 = vadd.f32 %v465, %v466
    %468 = vadd.xlane.f32.xlu0 %v467
    %v469 = vpop.xlane.xlu0 %468
    %v470 = vrot.slane %v469, 4
    %v471 = vadd.f32 %v469, %v470
    %v472 = vrot.slane %v471, 2
    %v473 = vadd.f32 %v471, %v472
    %v474 = vrot.slane %v473, 1
    %v475 = vadd.f32 %v473, %v474
    %s476 = vtos %v475
    %v477 = vrcp.pop 2048.0
    %s478 = vtos %v477
    %s479 = smul.f32 %s464, %s478
    %v480 = vrcp.pop 2048.0
    %s481 = vtos %v480
    %s482 = smul.f32 %s476, %s481
    %s483 = smul.f32 %s479, %s479
    %s484 = ssub.f32 %s482, %s483
    %v485 = vstv %s479
    %v486 = vsub.f32 %v447, %v485
    %v487 = vsub.f32 %v452, %v485
    %s488 = sadd.f32 %s484, 1e-05
    %v489 = vstv %s488
    %v490 = vrsqrt.pop %v489
    %s491 = vtos %v490
    %v492 = vstv %s491
    %v493 = vmul.f32 %v486, %v492
    %v494 = vmul.f32 %v487, %v492
    %v495 = vsub.f32 0.0, %v493
    %v496 = vsub.f32 0.0, %v494
    %v497 = vmul.f32 %v495, 1.442695
    %v498 = vpow.pop %v497
    %v499 = vmul.f32 %v496, 1.442695
    %v500 = vpow.pop %v499
    %v501 = vadd.f32 %v498, 1.0
    %v502 = vadd.f32 %v500, 1.0
    %v503 = vrcp.pop %v501
    %v504 = vrcp.pop %v502
    %v505 = vmul.f32 %v493, %v503
    %v506 = vmul.f32 %v494, %v504
    %507 = vrot.lane.b32.xlu0 %v505, 1
    %v508 = vpop.permute.xlu0 %507
    %509 = vrot.lane.b32.xlu0 %v506, 1
    %v510 = vpop.permute.xlu0 %509
    %v511 = vsel %vm58, 0.0, %v508
    %v512 = vsel %vm58, 0.0, %v510
    %513 = vrot.lane.b32.xlu0 %v505, 127
    %v514 = vpop.permute.xlu0 %513
    %515 = vrot.lane.b32.xlu0 %v506, 127
    %v516 = vpop.permute.xlu0 %515
    %v517 = vsel %vm59, 0.0, %v514
    %v518 = vsel %vm59, 0.0, %v516
    %519 = vmatprep.subr.mxu0 0.0
    %520 = vmatpush1.msra.mxu0 0.0
    %521 = vmatprep.subr.mxu0 0.0
    %522 = vmatpush1.msra.mxu0 0.0
    %523 = vmatprep.subr.mxu0 0.0
    %524 = vmatpush1.msra.mxu0 0.0
    %525 = vmatprep.subr.mxu0 0.0
    %526 = vmatpush1.msra.mxu0 0.0
    %527 = vmatprep.subr.mxu0 0.0
    %528 = vmatpush1.msra.mxu0 0.0
    %529 = vmatprep.subr.mxu0 0.0
    %530 = vmatpush1.msra.mxu0 0.0
    %531 = vmatprep.subr.mxu0 0.0
    %532 = vmatpush1.msra.mxu0 0.0
    %533 = vmatprep.subr.mxu0 0.0
    %534 = vmatpush1.msra.mxu0 0.0
    %535 = vmatprep.subr.mxu0 0.0
    %536 = vmatpush1.msra.mxu0 0.0
    %537 = vmatprep.subr.mxu0 0.0
    %538 = vmatpush1.msra.mxu0 %v87
    %539 = vmatprep.subr.mxu0 0.0
    %540 = vmatpush1.msra.mxu0 %v518
    %541 = vmatprep.subr.mxu0 0.0
    %542 = vmatpush1.msra.mxu0 %v517
    %543 = vmatprep.subr.mxu0 0.0
    %544 = vmatpush1.msra.mxu0 %v506
    %545 = vmatprep.subr.mxu0 0.0
    %546 = vmatpush1.msra.mxu0 %v505
    %547 = vmatprep.subr.mxu0 0.0
    %548 = vmatpush1.msra.mxu0 %v512
    %549 = vmatprep.subr.mxu0 0.0
    %550 = vmatpush1.msra.mxu0 %v511
    %551 = vmatprep.subr.mxu0 0.0
    %552 = vmatpush2.msra.mxu0 0.0
    %553 = vmatprep.subr.mxu0 0.0
    %554 = vmatpush2.msra.mxu0 0.0
    %555 = vmatprep.subr.mxu0 0.0
    %556 = vmatpush2.msra.mxu0 0.0
    %557 = vmatprep.subr.mxu0 0.0
    %558 = vmatpush2.msra.mxu0 0.0
    %559 = vmatprep.subr.mxu0 0.0
    %560 = vmatpush2.msra.mxu0 0.0
    %561 = vmatprep.subr.mxu0 0.0
    %562 = vmatpush2.msra.mxu0 0.0
    %563 = vmatprep.subr.mxu0 0.0
    %564 = vmatpush2.msra.mxu0 0.0
    %565 = vmatprep.subr.mxu0 0.0
    %566 = vmatpush2.msra.mxu0 0.0
    %567 = vmatprep.subr.mxu0 0.0
    %568 = vmatpush2.msra.mxu0 0.0
    %569 = vmatprep.subr.mxu0 0.0
    %570 = vmatpush2.msra.mxu0 0.0
    %571 = vmatprep.subr.mxu0 0.0
    %572 = vmatpush2.msra.mxu0 0.0
    %573 = vmatprep.subr.mxu0 0.0
    %574 = vmatpush2.msra.mxu0 0.0
    %575 = vmatprep.subr.mxu0 0.0
    %576 = vmatpush2.msra.mxu0 0.0
    %577 = vmatprep.subr.mxu0 0.0
    %578 = vmatpush2.msra.mxu0 0.0
    %579 = vmatprep.subr.mxu0 0.0
    %580 = vmatpush2.msra.mxu0 0.0
    %581 = vmatprep.subr.mxu0 0.0
    %582 = vmatpush2.msra.mxu0 0.0
    %583 = vmatprep.mubr.f32.mxu0 0.0
    %584 = vmatmul.mubr.f32.gmra.mxu0 %v229
    %v585 = vpop.f32.mrf.mxu0
    %v586 = vadd.f32 0.0, %v585
    %v587 = vpop.f32.mrf.mxu0
    %588 = vmatprep.mubr.f32.mxu0 0.0
    %589 = vmatmul.mubr.f32.gmra.mxu0 %v232
    %v590 = vpop.f32.mrf.mxu0
    %v591 = vadd.f32 0.0, %v590
    %v592 = vpop.f32.mrf.mxu0
    %593 = vdwg.mxu0
    %v594 = vadd.f32 %v586, %v591
    %595 = vadd.xlane.f32.xlu0 %v594
    %v596 = vpop.xlane.xlu0 %595
    %v597 = vrot.slane %v596, 4
    %v598 = vadd.f32 %v596, %v597
    %v599 = vrot.slane %v598, 2
    %v600 = vadd.f32 %v598, %v599
    %v601 = vrot.slane %v600, 1
    %v602 = vadd.f32 %v600, %v601
    %s603 = vtos %v602
    %v604 = vmul.f32 %v586, %v586
    %v605 = vmul.f32 %v591, %v591
    %v606 = vadd.f32 %v604, %v605
    %607 = vadd.xlane.f32.xlu0 %v606
    %v608 = vpop.xlane.xlu0 %607
    %v609 = vrot.slane %v608, 4
    %v610 = vadd.f32 %v608, %v609
    %v611 = vrot.slane %v610, 2
    %v612 = vadd.f32 %v610, %v611
    %v613 = vrot.slane %v612, 1
    %v614 = vadd.f32 %v612, %v613
    %s615 = vtos %v614
    %v616 = vrcp.pop 2048.0
    %s617 = vtos %v616
    %s618 = smul.f32 %s603, %s617
    %v619 = vrcp.pop 2048.0
    %s620 = vtos %v619
    %s621 = smul.f32 %s615, %s620
    %s622 = smul.f32 %s618, %s618
    %s623 = ssub.f32 %s621, %s622
    %v624 = vstv %s618
    %v625 = vsub.f32 %v586, %v624
    %v626 = vsub.f32 %v591, %v624
    %s627 = sadd.f32 %s623, 1e-05
    %v628 = vstv %s627
    %v629 = vrsqrt.pop %v628
    %s630 = vtos %v629
    %v631 = vstv %s630
    %v632 = vmul.f32 %v625, %v631
    %v633 = vmul.f32 %v626, %v631
    %v634 = vadd.f32 %v632, %v366
    %v635 = vadd.f32 %v633, %v367
    %v636 = vsub.f32 0.0, %v634
    %v637 = vsub.f32 0.0, %v635
    %v638 = vmul.f32 %v636, 1.442695
    %v639 = vpow.pop %v638
    %v640 = vmul.f32 %v637, 1.442695
    %v641 = vpow.pop %v640
    %v642 = vadd.f32 %v639, 1.0
    %v643 = vadd.f32 %v641, 1.0
    %v644 = vrcp.pop %v642
    %v645 = vrcp.pop %v643
    %v646 = vmul.f32 %v634, %v644
    %v647 = vmul.f32 %v635, %v645
    %s648 = scalar_lea.vmem [#allocation8], 16
    %649 = vst [vmem:[%s648] sm:$0xff] %v646
    %650 = vst [vmem:[%s648 + $0x8] sm:$0xff] %v647
    // Predicated region
    $region26: #{tpu_custom_call.1} parent=1 // pred_check
      _
    $region27: #{tpu_custom_call.1} parent=1 // pred_check_branch
      %652 = sbr.rel (0) target = $region29
    $region28: #{tpu_custom_call.1} parent=1 // pred_region
      %s654 = ssub.s32 512, 512
      %655 = vsyncadd [#allocation4], %s654
      %s656 = sshll.u32 [#allocation8], 4
      %s657 = int_to_ptr.vmem [resolvable:$true] %s656
      %662 = dma.vmem_to_hbm [thread:$0]  %s657, 512, %s3, [#allocation4], 128, 128, 8
    $region29: #{tpu_custom_call.1} parent=1 // pred_fallthru
      _
    // Predicated region
    $region30: #{tpu_custom_call.1} parent=1 // pred_check
      _
    $region31: #{tpu_custom_call.1} parent=1 // pred_check_branch
      %664 = sbr.rel (0) target = $region33
    $region32: #{tpu_custom_call.1} parent=1 // pred_region
      %665 = dma.done [#allocation4], 512
    $region33: #{tpu_custom_call.1} parent=1 // pred_fallthru
      _
    %666 = vsyncpa [#allocation3], 1
    %667 = vsyncpa [#allocation6], 1
    %668 = vsyncpa [#allocation4], 1

</llo_original>
